<compile_context>
chip_gen: v7x
topology: tpu7x:2x2x1
jax: 0.10.0
libtpu: 0.0.40
codegen_flags: <defaults>
</compile_context>

<pallas_src>
import math
import functools

import jax
import jax.numpy as jnp
from jax.experimental import pallas as pl
from jax.experimental.pallas import tpu as pltpu

H1 = 64
H2 = 64
LANES = 128       # fused actor|critic lane width (2 * H1)
OUT_LANES = 8     # narrow output slab: lane 0 = logprob, lane 1 = value
LOG_2PI = math.log(2.0 * math.pi)


def _round_up(x, m):
    return ((x + m - 1) // m) * m


# ----------------------------------------------------------------------------
# Kernel
# ----------------------------------------------------------------------------
def actor_critic_kernel(sp, k, xa_ref, w_ref, s_ref, out_ref):
    """One batch tile: fused actor+critic towers + diag-MVN log_prob.

    sp      : padded state feature dim (multiple of 8)
    k       : action dim
    xa_ref  : [TB, sp+k]        f32, lanes [0,sp) = state, [sp,sp+k) = action
    w_ref   : [sp+256, 128]     resident weight slab (f32 or bf16)
    s_ref   : [8, 128]          resident f32 stats slab (biases, inv_var, const)
    out_ref : [TB, 8]           lane 0 = logprob, lane 1 = state value
    """
    cd = w_ref.dtype                      # matmul compute dtype (f32 or bf16)
    f32 = jnp.float32

    # carve the packed parameter slabs (static, sublane-aligned slices)
    w1 = w_ref[0:sp, :]                       # [sp, 128]  fused layer 1
    w2 = w_ref[sp:sp + LANES, :]              # [128, 128] block-diag layer 2
    w3 = w_ref[sp + LANES:sp + 2 * LANES, :]  # [128, 128] block-diag heads
    b1 = s_ref[0:1, :]
    b2 = s_ref[1:2, :]
    b3 = s_ref[2:3, :]
    inv_var = s_ref[3:4, 0:k]                 # [1, k]  exp(-logvar)
    lp_const = s_ref[4:5, 0:1]                # [1, 1]  -0.5*(K*log2pi + sum logvar)

    xa = xa_ref[...]
    x = xa[:, 0:sp].astype(cd)                # [TB, sp] state features
    a = xa[:, sp:sp + k]                      # [TB, k]  action (f32)

    # fused towers: 3 full-lane MXU matmuls, f32 accumulation, f32 elementwise
    h = jnp.tanh(jnp.dot(x, w1, preferred_element_type=f32) + b1)
    h = jnp.tanh(jnp.dot(h.astype(cd), w2, preferred_element_type=f32) + b2)
    head = jnp.dot(h.astype(cd), w3, preferred_element_type=f32) + b3  # [TB,128]
    # head lanes: [0,k) = actor pre-tanh means, lane k = critic value (pre-tanh)

    mu = jnp.tanh(head[:, 0:k])               # [TB, k] actor means
    diff = a - mu
    maha = jnp.sum(diff * diff * inv_var, axis=-1, keepdims=True)      # [TB, 1]
    logprob = lp_const - 0.5 * maha                                    # [TB, 1]
    value = head[:, k:k + 1]                                           # [TB, 1]

    tb = xa.shape[0]
    col = jax.lax.broadcasted_iota(jnp.int32, (tb, OUT_LANES), 1)
    out_ref[...] = jnp.where(col == 0, logprob,
                             jnp.where(col == 1, value, 0.0))


# ----------------------------------------------------------------------------
# Parameter construction / packing
# ----------------------------------------------------------------------------
def make_params(key, state_dim, action_dim, action_std):
    """Deterministic synthetic parameters (PyTorch-Linear-style uniform init).

    Weights are stored as [in_features, out_features] (transpose of torch)."""
    def linear(k, fan_in, fan_out):
        k1, k2 = jax.random.split(k)
        bound = 1.0 / math.sqrt(fan_in)
        w = jax.random.uniform(k1, (fan_in, fan_out), jnp.float32, -bound, bound)
        b = jax.random.uniform(k2, (1, fan_out), jnp.float32, -bound, bound)
        return w, b

    keys = jax.random.split(key, 6)
    aw1, ab1 = linear(keys[0], state_dim, H1)
    aw2, ab2 = linear(keys[1], H1, H2)
    aw3, ab3 = linear(keys[2], H2, action_dim)
    cw1, cb1 = linear(keys[3], state_dim, H1)
    cw2, cb2 = linear(keys[4], H1, H2)
    cw3, cb3 = linear(keys[5], H2, 1)
    logvar = jnp.full((1, action_dim), math.log(action_std * action_std),
                      dtype=jnp.float32)
    return (aw1, ab1, aw2, ab2, aw3, ab3,
            cw1, cb1, cw2, cb2, cw3, cb3, logvar)


def pack_params(params, state_dim, action_dim, compute_dtype=jnp.float32):
    """Pack the 13 per-layer tensors into 2 lane-dense slabs.

    On v6e/v7x pass compute_dtype=jnp.bfloat16 to halve weight traffic and use
    the bf16 MXU path (biases / stats stay f32; accumulation stays f32).
    Slabs are kept separate so the f32 stats row precision is preserved even
    when weights are bf16; both are VMEM-resident across the grid."""
    (aw1, ab1, aw2, ab2, aw3, ab3,
     cw1, cb1, cw2, cb2, cw3, cb3, logvar) = params
    assert H1 == H2 and 2 * H1 == LANES, "fused layout assumes H1 == H2 == 64"
    assert action_dim + 1 <= LANES, "critic value shares lane K of the fused head"
    S, K, H, W = state_dim, action_dim, H1, LANES
    SP = _round_up(S, 8)

    # weight slab: [SP + 256, 128]
    w1 = jnp.zeros((SP, W), jnp.float32)
    w1 = w1.at[:S, :H].set(aw1).at[:S, H:2 * H].set(cw1)
    w2 = jnp.zeros((W, W), jnp.float32)
    w2 = w2.at[:H, :H].set(aw2).at[H:, H:].set(cw2)
    w3 = jnp.zeros((W, W), jnp.float32)
    w3 = w3.at[:H, :K].set(aw3).at[H:, K:K + 1].set(cw3)
    w_slab = jnp.concatenate([w1, w2, w3], axis=0).astype(compute_dtype)

    # stats slab: [8, 128] f32
    b1 = jnp.concatenate([ab1, cb1], axis=-1)                          # [1,128]
    b2 = jnp.concatenate([ab2, cb2], axis=-1)                          # [1,128]
    b3 = jnp.zeros((1, W), jnp.float32).at[:, :K].set(ab3).at[:, K:K + 1].set(cb3)
    inv_var = jnp.zeros((1, W), jnp.float32).at[:, :K].set(jnp.exp(-logvar))
    sum_logvar = jnp.sum(logvar)
    lp_const = -0.5 * (K * LOG_2PI + sum_logvar)
    const_row = jnp.zeros((1, W), jnp.float32).at[0, 0].set(lp_const)
    pad = jnp.zeros((3, W), jnp.float32)
    s_slab = jnp.concatenate([b1, b2, b3, inv_var, const_row, pad], axis=0)

    entropy_const = 0.5 * K * (1.0 + LOG_2PI) + 0.5 * sum_logvar
    return w_slab, s_slab, entropy_const


# ----------------------------------------------------------------------------
# Wrapper
# ----------------------------------------------------------------------------
@functools.partial(jax.jit, static_argnames=("action_dim", "block_b"))
def evaluate(state, action, w_slab, s_slab, entropy_const, *, action_dim,
             block_b=None):
    B, S = state.shape
    K = action_dim
    SP = _round_up(S, 8)
    F = SP + K
    assert w_slab.shape[0] == SP + 2 * LANES, "slab / state_dim mismatch"

    # Batch tile: small B -> single tile; large B -> big tiles (amortize the
    # ~0.35us per-step overhead) while keeping >=8 grid steps so v7x's two
    # TensorCores each get >=4 steps of DMA/compute overlap.  VMEM is never
    # the constraint (worst case ~ a few MiB double-buffered, << 32/64 MiB).
    if block_b is None:
        if B <= 512:
            tb = _round_up(max(B, 8), 8)
        else:
            tb = min(4096, max(512, _round_up((B + 7) // 8, 8)))
    else:
        tb = _round_up(block_b, 8)
    Bp = _round_up(B, tb)

    # Fused [state | action] input slab, padded only where actually needed
    # (no 128-lane action inflation, no extra pad pass when shapes line up).
    st = state.astype(jnp.float32)
    ac = action.astype(jnp.float32)
    if Bp == B and SP == S:
        xa = jnp.concatenate([st, ac], axis=1)
    else:
        xa = jnp.zeros((Bp, F), jnp.float32)
        xa = xa.at[:B, :S].set(st).at[:B, SP:SP + K].set(ac)

    kernel = functools.partial(actor_critic_kernel, SP, K)
    out = pl.pallas_call(
        kernel,
        out_shape=jax.ShapeDtypeStruct((Bp, OUT_LANES), jnp.float32),
        grid_spec=pltpu.PrefetchScalarGridSpec(
            num_scalar_prefetch=0,
            grid=(Bp // tb,),
            in_specs=[
                pl.BlockSpec((tb, F), lambda i: (i, 0)),            # state|action tile
                pl.BlockSpec((SP + 2 * LANES, LANES),
                             lambda i: (0, 0)),                     # weights (resident)
                pl.BlockSpec((8, LANES), lambda i: (0, 0)),         # stats (resident)
            ],
            out_specs=pl.BlockSpec((tb, OUT_LANES), lambda i: (i, 0)),
        ),
        compiler_params=pltpu.CompilerParams(
            dimension_semantics=("parallel",)),
    )(xa, w_slab, s_slab)

    # padded batch rows (if any) are stripped here; keep this slice.
    logprob = out[:B, 0]
    value = out[:B, 1]
    # entropy is batch-independent; hoisted out of the kernel entirely
    entropy = jnp.full((B,), entropy_const, dtype=jnp.float32)
    return logprob, value, entropy


# ----------------------------------------------------------------------------
# Pure-JAX reference (mirrors the PyTorch module)
# ----------------------------------------------------------------------------
def reference(state, action, params, action_dim):
    (aw1, ab1, aw2, ab2, aw3, ab3,
     cw1, cb1, cw2, cb2, cw3, cb3, logvar) = params
    h = jnp.tanh(state @ aw1 + ab1)
    h = jnp.tanh(h @ aw2 + ab2)
    mu = jnp.tanh(h @ aw3 + ab3)
    hc = jnp.tanh(state @ cw1 + cb1)
    hc = jnp.tanh(hc @ cw2 + cb2)
    val = hc @ cw3 + cb3
    var = jnp.exp(logvar)
    diff = action - mu
    maha = jnp.sum(diff * diff / var, axis=-1)
    slv = jnp.sum(logvar)
    k = float(action_dim)
    lp = -0.5 * (maha + k * LOG_2PI) - 0.5 * slv
    ent = jnp.full((state.shape[0],), 0.5 * k * (1.0 + LOG_2PI) + 0.5 * slv)
    return lp, val[:, 0], ent


if __name__ == "__main__":
    # --- config 1: aligned shapes, single tile ---
    state_dim, action_dim, action_std = 32, 4, 0.5
    B = 8
    key = jax.random.PRNGKey(0)
    kp, ks, ka = jax.random.split(key, 3)
    params = make_params(kp, state_dim, action_dim, action_std)
    state = jax.random.normal(ks, (B, state_dim), dtype=jnp.float32)
    action = jax.random.normal(ka, (B, action_dim), dtype=jnp.float32)

    # f32 weights here; on v6e/v7x use compute_dtype=jnp.bfloat16 (loosen
    # tolerance to ~1e-2).
    w_slab, s_slab, ent_const = pack_params(params, state_dim, action_dim)

    logprob, value, entropy = evaluate(state, action, w_slab, s_slab, ent_const,
                                       action_dim=action_dim)
    jax.block_until_ready((logprob, value, entropy))

    with jax.default_matmul_precision("highest"):
        lp_ref, v_ref, e_ref = reference(state, action, params, action_dim)
    assert jnp.allclose(logprob, lp_ref, atol=5e-3, rtol=1e-3), "logprob mismatch"
    assert jnp.allclose(value, v_ref, atol=5e-3, rtol=1e-3), "value mismatch"
    assert jnp.allclose(entropy, e_ref, atol=1e-4), "entropy mismatch"

    # --- config 2: unaligned feature dim, multi-step grid, padded last tile ---
    state_dim2, action_dim2 = 20, 6
    B2 = 300
    k2 = jax.random.PRNGKey(1)
    kp2, ks2, ka2 = jax.random.split(k2, 3)
    params2 = make_params(kp2, state_dim2, action_dim2, 0.5)
    state2 = jax.random.normal(ks2, (B2, state_dim2), dtype=jnp.float32)
    action2 = jax.random.normal(ka2, (B2, action_dim2), dtype=jnp.float32)
    w_slab2, s_slab2, ent_const2 = pack_params(params2, state_dim2, action_dim2)

    lp2, v2, e2 = evaluate(state2, action2, w_slab2, s_slab2, ent_const2,
                           action_dim=action_dim2, block_b=128)
    jax.block_until_ready((lp2, v2, e2))
    with jax.default_matmul_precision("highest"):
        lp2_ref, v2_ref, e2_ref = reference(state2, action2, params2, action_dim2)
    assert jnp.allclose(lp2, lp2_ref, atol=5e-3, rtol=1e-3), "logprob mismatch (cfg2)"
    assert jnp.allclose(v2, v2_ref, atol=5e-3, rtol=1e-3), "value mismatch (cfg2)"
    assert jnp.allclose(e2, e2_ref, atol=1e-4), "entropy mismatch (cfg2)"

    print("KERNEL_OK")
</pallas_src>

<mosaic_0001>
module attributes {stable_mosaic.version = 11 : i64} {
  func.func @actor_critic_kernel(%arg0: i32, %arg1: memref<8x36xf32, #tpu.memory_space<vmem>>, %arg2: memref<288x128xf32, #tpu.memory_space<vmem>>, %arg3: memref<8x128xf32, #tpu.memory_space<vmem>>, %arg4: memref<8x8xf32, #tpu.memory_space<vmem>>) attributes {dimension_semantics = [#tpu.dimension_semantics<parallel>], iteration_bounds = array<i64: 1>, scalar_prefetch = 0 : i64, scratch_operands = 0 : i64, tpu.core_type = #tpu.core_type<tc>, window_params = [{transform_indices = @transform_0, window_bounds = array<i64: 8, 36>}, {pipeline_mode = #tpu.pipeline_mode<synchronous>, transform_indices = @transform_1, window_bounds = array<i64: 288, 128>}, {pipeline_mode = #tpu.pipeline_mode<synchronous>, transform_indices = @transform_2, window_bounds = array<i64: 8, 128>}, {transform_indices = @transform_3, window_bounds = array<i64: 8, 8>}]} {
    %c0 = arith.constant 0 : index
    %c0_0 = arith.constant 0 : index
    %0 = vector.load %arg2[%c0, %c0_0] : memref<288x128xf32, #tpu.memory_space<vmem>>, vector<32x128xf32>
    %c32 = arith.constant 32 : index
    %c0_1 = arith.constant 0 : index
    %1 = vector.load %arg2[%c32, %c0_1] : memref<288x128xf32, #tpu.memory_space<vmem>>, vector<128x128xf32>
    %c160 = arith.constant 160 : index
    %c0_2 = arith.constant 0 : index
    %2 = vector.load %arg2[%c160, %c0_2] : memref<288x128xf32, #tpu.memory_space<vmem>>, vector<128x128xf32>
    %c0_3 = arith.constant 0 : index
    %c0_4 = arith.constant 0 : index
    %3 = vector.load %arg3[%c0_3, %c0_4] : memref<8x128xf32, #tpu.memory_space<vmem>>, vector<1x128xf32>
    %c1 = arith.constant 1 : index
    %c0_5 = arith.constant 0 : index
    %4 = vector.load %arg3[%c1, %c0_5] : memref<8x128xf32, #tpu.memory_space<vmem>>, vector<1x128xf32>
    %c2 = arith.constant 2 : index
    %c0_6 = arith.constant 0 : index
    %5 = vector.load %arg3[%c2, %c0_6] : memref<8x128xf32, #tpu.memory_space<vmem>>, vector<1x128xf32>
    %c3 = arith.constant 3 : index
    %c0_7 = arith.constant 0 : index
    %6 = vector.load %arg3[%c3, %c0_7] : memref<8x128xf32, #tpu.memory_space<vmem>>, vector<1x4xf32>
    %c4 = arith.constant 4 : index
    %c0_8 = arith.constant 0 : index
    %7 = vector.load %arg3[%c4, %c0_8] : memref<8x128xf32, #tpu.memory_space<vmem>>, vector<1x1xf32>
    %c0_9 = arith.constant 0 : index
    %c0_10 = arith.constant 0 : index
    %8 = vector.load %arg1[%c0_9, %c0_10] : memref<8x36xf32, #tpu.memory_space<vmem>>, vector<8x36xf32>
    %9 = vector.extract_strided_slice %8 {offsets = [0, 0], sizes = [8, 32], strides = [1, 1]} : vector<8x36xf32> to vector<8x32xf32>
    %10 = vector.extract_strided_slice %8 {offsets = [0, 32], sizes = [8, 4], strides = [1, 1]} : vector<8x36xf32> to vector<8x4xf32>
    %cst = arith.constant dense<0.000000e+00> : vector<8x128xf32>
    %11 = tpu.matmul %9, %0, %cst {dimension_numbers = #tpu.dot_dimension_numbers<[1], [0], [0], [1], [0, 0, 1, 1], [], []>} : vector<8x32xf32>, vector<32x128xf32>, vector<8x128xf32> -> vector<8x128xf32>
    %12 = vector.broadcast %3 : vector<1x128xf32> to vector<8x128xf32>
    %13 = arith.addf %11, %12 : vector<8x128xf32>
    %14 = math.tanh %13 : vector<8x128xf32>
    %cst_11 = arith.constant dense<0.000000e+00> : vector<8x128xf32>
    %15 = tpu.matmul %14, %1, %cst_11 {dimension_numbers = #tpu.dot_dimension_numbers<[1], [0], [0], [1], [0, 0, 1, 1], [], []>} : vector<8x128xf32>, vector<128x128xf32>, vector<8x128xf32> -> vector<8x128xf32>
    %16 = vector.broadcast %4 : vector<1x128xf32> to vector<8x128xf32>
    %17 = arith.addf %15, %16 : vector<8x128xf32>
    %18 = math.tanh %17 : vector<8x128xf32>
    %cst_12 = arith.constant dense<0.000000e+00> : vector<8x128xf32>
    %19 = tpu.matmul %18, %2, %cst_12 {dimension_numbers = #tpu.dot_dimension_numbers<[1], [0], [0], [1], [0, 0, 1, 1], [], []>} : vector<8x128xf32>, vector<128x128xf32>, vector<8x128xf32> -> vector<8x128xf32>
    %20 = vector.broadcast %5 : vector<1x128xf32> to vector<8x128xf32>
    %21 = arith.addf %19, %20 : vector<8x128xf32>
    %22 = vector.extract_strided_slice %21 {offsets = [0, 0], sizes = [8, 4], strides = [1, 1]} : vector<8x128xf32> to vector<8x4xf32>
    %23 = math.tanh %22 : vector<8x4xf32>
    %24 = arith.subf %10, %23 : vector<8x4xf32>
    %25 = arith.mulf %24, %24 : vector<8x4xf32>
    %26 = vector.broadcast %6 : vector<1x4xf32> to vector<8x4xf32>
    %27 = arith.mulf %25, %26 : vector<8x4xf32>
    %cst_13 = arith.constant dense<0.000000e+00> : vector<8xf32>
    %28 = vector.multi_reduction <add>, %27, %cst_13 [1] : vector<8x4xf32> to vector<8xf32>
    %29 = vector.shape_cast %28 : vector<8xf32> to vector<8x1xf32>
    %cst_14 = arith.constant 5.000000e-01 : f32
    %30 = vector.broadcast %cst_14 : f32 to vector<8x1xf32>
    %31 = arith.mulf %30, %29 : vector<8x1xf32>
    %32 = vector.broadcast %7 : vector<1x1xf32> to vector<8x1xf32>
    %33 = arith.subf %32, %31 : vector<8x1xf32>
    %34 = vector.extract_strided_slice %21 {offsets = [0, 4], sizes = [8, 1], strides = [1, 1]} : vector<8x128xf32> to vector<8x1xf32>
    %35 = tpu.iota {dimensions = array<i32: 1>} : vector<8x8xi32>
    %c0_i32 = arith.constant 0 : i32
    %36 = vector.broadcast %c0_i32 : i32 to vector<8x8xi32>
    %37 = arith.cmpi eq, %35, %36 : vector<8x8xi32>
    %c1_i32 = arith.constant 1 : i32
    %38 = vector.broadcast %c1_i32 : i32 to vector<8x8xi32>
    %39 = arith.cmpi eq, %35, %38 : vector<8x8xi32>
    %cst_15 = arith.constant 0.000000e+00 : f32
    %40 = vector.shape_cast %34 : vector<8x1xf32> to vector<8x1xf32>
    %41 = vector.broadcast %40 : vector<8x1xf32> to vector<8x8xf32>
    %42 = vector.broadcast %cst_15 : f32 to vector<8x8xf32>
    %43 = arith.select %39, %41, %42 : vector<8x8xi1>, vector<8x8xf32>
    %44 = vector.shape_cast %33 : vector<8x1xf32> to vector<8x1xf32>
    %45 = vector.broadcast %44 : vector<8x1xf32> to vector<8x8xf32>
    %46 = arith.select %37, %45, %43 : vector<8x8xi1>, vector<8x8xf32>
    %c0_16 = arith.constant 0 : index
    %c0_17 = arith.constant 0 : index
    %47 = vector.load %arg4[%c0_16, %c0_17] : memref<8x8xf32, #tpu.memory_space<vmem>>, vector<8x8xf32>
    tpu.vector_store %arg4[%c0_16, %c0_17], %46 {strides = array<i32>} : memref<8x8xf32, #tpu.memory_space<vmem>>, vector<8x8xf32>,
    return
  }
  func.func @transform_0(%arg0: i32) -> (i32, i32) {
    %c0_i32 = arith.constant 0 : i32
    %c0_i32_0 = arith.constant 0 : i32
    return %arg0, %c0_i32 : i32, i32
  }
  func.func @transform_1(%arg0: i32) -> (i32, i32) {
    %c0_i32 = arith.constant 0 : i32
    %c0_i32_0 = arith.constant 0 : i32
    %c0_i32_1 = arith.constant 0 : i32
    return %c0_i32, %c0_i32_0 : i32, i32
  }
  func.func @transform_2(%arg0: i32) -> (i32, i32) {
    %c0_i32 = arith.constant 0 : i32
    %c0_i32_0 = arith.constant 0 : i32
    %c0_i32_1 = arith.constant 0 : i32
    return %c0_i32, %c0_i32_0 : i32, i32
  }
  func.func @transform_3(%arg0: i32) -> (i32, i32) {
    %c0_i32 = arith.constant 0 : i32
    %c0_i32_0 = arith.constant 0 : i32
    return %arg0, %c0_i32 : i32, i32
  }
}

</mosaic_0001>

<llo_original>
// kernel: evaluate.1
$region0: #{evaluate.1}
  #allocation0 [shape = 'u32[]', space=smem, size = 0x4, offset = 0x4, fixed_abs, tag = 'smem constant byte address 0x4 - core index']
  #allocation1 [shape = 'u32[144,128]{1,0:T(1,128)}', space=vmem, size = 0x12000, scoped, tag = 'internal scratch']
  %s0 = inlined_call_operand.vmem [shape: f32[8,36], index: 0, kind: input, shape index: {}]
  %s1 = inlined_call_operand.hbm [shape: f32[288,128], index: 1, kind: input, shape index: {}]
  %s2 = inlined_call_operand.vmem [shape: f32[8,128], index: 2, kind: input, shape index: {}]
  %s3 = inlined_call_operand.vmem [shape: f32[8,8], index: 3, kind: output, shape index: {}]
  %s4 = sld [smem:[#allocation0]]
  $region26: #{evaluate.1} parent=0
    _
  %s6 = ssub.s32 1, %s4
  %s7 = scalar_select 0, %s6, %s4
  $region1: #{evaluate.1} parent=0
    #allocation2 [shape = 'u8[147456]{0}', space=vmem, size = 0x24000, scoped, tag = 'input window, operand 1, single buffered']
    #allocation3 [shape = 's32[1]{0}', space=sflag, size = 0x4, scoped, tag = 'scoped memory for evaluate.1']
    %8 = vsyncpa [#allocation3], 0
    // Predicated region
    $region2: #{evaluate.1} parent=1 // pred_check
      _
    $region3: #{evaluate.1} parent=1 // pred_check_branch
      %10 = sbr.rel (0) target = $region5
    $region4: #{evaluate.1} parent=1 // pred_region
      _
    $region5: #{evaluate.1} parent=1 // pred_fallthru
      _
    // Predicated region
    $region6: #{evaluate.1} parent=1 // pred_check
      _
    $region7: #{evaluate.1} parent=1 // pred_check_branch
      %12 = sbr.rel (0) target = $region9
    $region8: #{evaluate.1} parent=1 // pred_region
      %s14 = ssub.s32 4608, 4608
      %15 = vsyncadd [#allocation3], %s14
      %s16 = sshll.u32 [#allocation2], 4
      %s17 = int_to_ptr.vmem [resolvable:$true] %s16
      %22 = dma.hbm_to_vmem [thread:$0]  %s1, 4608, %s17, [#allocation3], 128, 128, 8
    $region9: #{evaluate.1} parent=1 // pred_fallthru
      _
    // Predicated region
    $region10: #{evaluate.1} parent=1 // pred_check
      _
    $region11: #{evaluate.1} parent=1 // pred_check_branch
      %24 = sbr.rel (0) target = $region13
    $region12: #{evaluate.1} parent=1 // pred_region
      _
    $region13: #{evaluate.1} parent=1 // pred_fallthru
      _
    // Predicated region
    $region14: #{evaluate.1} parent=1 // pred_check
      _
    $region15: #{evaluate.1} parent=1 // pred_check_branch
      %26 = sbr.rel (0) target = $region17
    $region16: #{evaluate.1} parent=1 // pred_region
      %27 = dma.done [#allocation3], 4608
    $region17: #{evaluate.1} parent=1 // pred_fallthru
      _
    %v28 = vld [vmem:[#allocation2] sm:$0xff]
    %v29 = vld [vmem:[#allocation2 + $0x8] sm:$0xff]
    %v30 = vld [vmem:[#allocation2 + $0x10] sm:$0xff]
    %v31 = vld [vmem:[#allocation2 + $0x18] sm:$0xff]
    %v32 = vld [vmem:[#allocation2 + $0x20] sm:$0xff]
    %v33 = vld [vmem:[#allocation2 + $0x28] sm:$0xff]
    %v34 = vld [vmem:[#allocation2 + $0x30] sm:$0xff]
    %v35 = vld [vmem:[#allocation2 + $0x38] sm:$0xff]
    %v36 = vld [vmem:[#allocation2 + $0x40] sm:$0xff]
    %v37 = vld [vmem:[#allocation2 + $0x48] sm:$0xff]
    %v38 = vld [vmem:[#allocation2 + $0x50] sm:$0xff]
    %v39 = vld [vmem:[#allocation2 + $0x58] sm:$0xff]
    %v40 = vld [vmem:[#allocation2 + $0x60] sm:$0xff]
    %v41 = vld [vmem:[#allocation2 + $0x68] sm:$0xff]
    %v42 = vld [vmem:[#allocation2 + $0x70] sm:$0xff]
    %v43 = vld [vmem:[#allocation2 + $0x78] sm:$0xff]
    %v44 = vld [vmem:[#allocation2 + $0x80] sm:$0xff]
    %v45 = vld [vmem:[#allocation2 + $0x88] sm:$0xff]
    %v46 = vld [vmem:[#allocation2 + $0x90] sm:$0xff]
    %v47 = vld [vmem:[#allocation2 + $0x98] sm:$0xff]
    %v48 = vld [vmem:[#allocation2 + $0xa0] sm:$0xff]
    %v49 = vld [vmem:[#allocation2 + $0xa8] sm:$0xff]
    %v50 = vld [vmem:[#allocation2 + $0xb0] sm:$0xff]
    %v51 = vld [vmem:[#allocation2 + $0xb8] sm:$0xff]
    %v52 = vld [vmem:[#allocation2 + $0xc0] sm:$0xff]
    %v53 = vld [vmem:[#allocation2 + $0xc8] sm:$0xff]
    %v54 = vld [vmem:[#allocation2 + $0xd0] sm:$0xff]
    %v55 = vld [vmem:[#allocation2 + $0xd8] sm:$0xff]
    %v56 = vld [vmem:[#allocation2 + $0xe0] sm:$0xff]
    %v57 = vld [vmem:[#allocation2 + $0xe8] sm:$0xff]
    %v58 = vld [vmem:[#allocation2 + $0xf0] sm:$0xff]
    %v59 = vld [vmem:[#allocation2 + $0xf8] sm:$0xff]
    %v60 = vld [vmem:[#allocation2 + $0x100] sm:$0xff]
    %v61 = vld [vmem:[#allocation2 + $0x108] sm:$0xff]
    %v62 = vld [vmem:[#allocation2 + $0x110] sm:$0xff]
    %v63 = vld [vmem:[#allocation2 + $0x118] sm:$0xff]
    %v64 = vld [vmem:[%s2] sm:$0x1]
    %v65 = vld [vmem:[%s2 + $0x1] sm:$0x1]
    %v66 = vld [vmem:[%s2 + $0x2] sm:$0x1]
    %v67 = vld [vmem:[%s2 + $0x3] sm:$0x1]
    %v68 = vld [vmem:[%s2 + $0x4] sm:$0x1]
    %v69 = vld [vmem:[%s0] sm:$0xff]
    %v70 = vlaneseq
    %v71 = vshrl.u32 %v70, 7
    %v72 = vsub.s32 0, %v71
    %v73 = vrot.slane %v64, %v72
    %vm74 = vcmask 261120
    %v76 = vsel %vm74, %v69, 0
    %78 = vmatprep.subr.mxu0 0.0
    %79 = vmatpush1.msra.mxu0 %v28
    %80 = vmatprep.subr.mxu0 0.0
    %81 = vmatpush1.msra.mxu0 %v29
    %82 = vmatprep.subr.mxu0 0.0
    %83 = vmatpush1.msra.mxu0 %v30
    %84 = vmatprep.subr.mxu0 0.0
    %85 = vmatpush1.msra.mxu0 %v31
    %86 = vmatprep.subr.mxu0 0.0
    %87 = vmatpush1.msra.mxu0 0.0
    %88 = vmatprep.subr.mxu0 0.0
    %89 = vmatpush1.msra.mxu0 0.0
    %90 = vmatprep.subr.mxu0 0.0
    %91 = vmatpush1.msra.mxu0 0.0
    %92 = vmatprep.subr.mxu0 0.0
    %93 = vmatpush1.msra.mxu0 0.0
    %94 = vmatprep.subr.mxu0 0.0
    %95 = vmatpush1.msra.mxu0 0.0
    %96 = vmatprep.subr.mxu0 0.0
    %97 = vmatpush1.msra.mxu0 0.0
    %98 = vmatprep.subr.mxu0 0.0
    %99 = vmatpush1.msra.mxu0 0.0
    %100 = vmatprep.subr.mxu0 0.0
    %101 = vmatpush1.msra.mxu0 0.0
    %102 = vmatprep.subr.mxu0 0.0
    %103 = vmatpush1.msra.mxu0 0.0
    %104 = vmatprep.subr.mxu0 0.0
    %105 = vmatpush1.msra.mxu0 0.0
    %106 = vmatprep.subr.mxu0 0.0
    %107 = vmatpush1.msra.mxu0 0.0
    %108 = vmatprep.subr.mxu0 0.0
    %109 = vmatpush1.msra.mxu0 0.0
    %110 = vmatprep.subr.mxu0 0.0
    %111 = vmatpush1.msra.mxu0 0.0
    %112 = vmatprep.subr.mxu0 0.0
    %113 = vmatpush1.msra.mxu0 0.0
    %114 = vmatprep.subr.mxu0 0.0
    %115 = vmatpush1.msra.mxu0 0.0
    %116 = vmatprep.subr.mxu0 0.0
    %117 = vmatpush1.msra.mxu0 0.0
    %118 = vmatprep.subr.mxu0 0.0
    %119 = vmatpush1.msra.mxu0 0.0
    %120 = vmatprep.subr.mxu0 0.0
    %121 = vmatpush1.msra.mxu0 0.0
    %122 = vmatprep.subr.mxu0 0.0
    %123 = vmatpush1.msra.mxu0 0.0
    %124 = vmatprep.subr.mxu0 0.0
    %125 = vmatpush1.msra.mxu0 0.0
    %126 = vmatprep.subr.mxu0 0.0
    %127 = vmatpush1.msra.mxu0 0.0
    %128 = vmatprep.subr.mxu0 0.0
    %129 = vmatpush1.msra.mxu0 0.0
    %130 = vmatprep.subr.mxu0 0.0
    %131 = vmatpush1.msra.mxu0 0.0
    %132 = vmatprep.subr.mxu0 0.0
    %133 = vmatpush1.msra.mxu0 0.0
    %134 = vmatprep.subr.mxu0 0.0
    %135 = vmatpush1.msra.mxu0 0.0
    %136 = vmatprep.subr.mxu0 0.0
    %137 = vmatpush1.msra.mxu0 0.0
    %138 = vmatprep.subr.mxu0 0.0
    %139 = vmatpush1.msra.mxu0 0.0
    %140 = vmatprep.subr.mxu0 0.0
    %141 = vmatpush1.msra.mxu0 0.0
    %142 = vmatprep.mubr.f32.mxu0 0.0
    %143 = vmatmul.mubr.f32.gmra.mrb[0].mxu0 %v76
    %v144 = vpop.f32.mrb[0].mxu0
    %v145 = vadd.f32 %v73, %v144
    %v146 = vpop.f32.mrb[0].mxu0
    %147 = vdwg.mxu0
    %v148 = vtanh.pop %v145
    %v149 = vlaneseq
    %v150 = vshrl.u32 %v149, 7
    %v151 = vsub.s32 0, %v150
    %v152 = vrot.slane %v65, %v151
    %153 = vmatprep.subr.mxu0 0.0
    %154 = vmatpush1.msra.mxu0 %v32
    %155 = vmatprep.subr.mxu0 0.0
    %156 = vmatpush1.msra.mxu0 %v33
    %157 = vmatprep.subr.mxu0 0.0
    %158 = vmatpush1.msra.mxu0 %v34
    %159 = vmatprep.subr.mxu0 0.0
    %160 = vmatpush1.msra.mxu0 %v35
    %161 = vmatprep.subr.mxu0 0.0
    %162 = vmatpush1.msra.mxu0 %v36
    %163 = vmatprep.subr.mxu0 0.0
    %164 = vmatpush1.msra.mxu0 %v37
    %165 = vmatprep.subr.mxu0 0.0
    %166 = vmatpush1.msra.mxu0 %v38
    %167 = vmatprep.subr.mxu0 0.0
    %168 = vmatpush1.msra.mxu0 %v39
    %169 = vmatprep.subr.mxu0 0.0
    %170 = vmatpush1.msra.mxu0 %v40
    %171 = vmatprep.subr.mxu0 0.0
    %172 = vmatpush1.msra.mxu0 %v41
    %173 = vmatprep.subr.mxu0 0.0
    %174 = vmatpush1.msra.mxu0 %v42
    %175 = vmatprep.subr.mxu0 0.0
    %176 = vmatpush1.msra.mxu0 %v43
    %177 = vmatprep.subr.mxu0 0.0
    %178 = vmatpush1.msra.mxu0 %v44
    %179 = vmatprep.subr.mxu0 0.0
    %180 = vmatpush1.msra.mxu0 %v45
    %181 = vmatprep.subr.mxu0 0.0
    %182 = vmatpush1.msra.mxu0 %v46
    %183 = vmatprep.subr.mxu0 0.0
    %184 = vmatpush1.msra.mxu0 %v47
    %185 = vmatprep.subr.mxu0 0.0
    %186 = vmatpush1.msra.mxu0 0.0
    %187 = vmatprep.subr.mxu0 0.0
    %188 = vmatpush1.msra.mxu0 0.0
    %189 = vmatprep.subr.mxu0 0.0
    %190 = vmatpush1.msra.mxu0 0.0
    %191 = vmatprep.subr.mxu0 0.0
    %192 = vmatpush1.msra.mxu0 0.0
    %193 = vmatprep.subr.mxu0 0.0
    %194 = vmatpush1.msra.mxu0 0.0
    %195 = vmatprep.subr.mxu0 0.0
    %196 = vmatpush1.msra.mxu0 0.0
    %197 = vmatprep.subr.mxu0 0.0
    %198 = vmatpush1.msra.mxu0 0.0
    %199 = vmatprep.subr.mxu0 0.0
    %200 = vmatpush1.msra.mxu0 0.0
    %201 = vmatprep.subr.mxu0 0.0
    %202 = vmatpush1.msra.mxu0 0.0
    %203 = vmatprep.subr.mxu0 0.0
    %204 = vmatpush1.msra.mxu0 0.0
    %205 = vmatprep.subr.mxu0 0.0
    %206 = vmatpush1.msra.mxu0 0.0
    %207 = vmatprep.subr.mxu0 0.0
    %208 = vmatpush1.msra.mxu0 0.0
    %209 = vmatprep.subr.mxu0 0.0
    %210 = vmatpush1.msra.mxu0 0.0
    %211 = vmatprep.subr.mxu0 0.0
    %212 = vmatpush1.msra.mxu0 0.0
    %213 = vmatprep.subr.mxu0 0.0
    %214 = vmatpush1.msra.mxu0 0.0
    %215 = vmatprep.subr.mxu0 0.0
    %216 = vmatpush1.msra.mxu0 0.0
    %217 = vmatprep.mubr.f32.mxu0 0.0
    %218 = vmatmul.mubr.f32.gmra.mrb[0].mxu0 %v148
    %v219 = vpop.f32.mrb[0].mxu0
    %v220 = vadd.f32 %v152, %v219
    %v221 = vpop.f32.mrb[0].mxu0
    %222 = vdwg.mxu0
    %v223 = vtanh.pop %v220
    %v224 = vlaneseq
    %v225 = vshrl.u32 %v224, 7
    %v226 = vsub.s32 0, %v225
    %v227 = vrot.slane %v66, %v226
    %228 = vmatprep.subr.mxu0 0.0
    %229 = vmatpush1.msra.mxu0 %v48
    %230 = vmatprep.subr.mxu0 0.0
    %231 = vmatpush1.msra.mxu0 %v49
    %232 = vmatprep.subr.mxu0 0.0
    %233 = vmatpush1.msra.mxu0 %v50
    %234 = vmatprep.subr.mxu0 0.0
    %235 = vmatpush1.msra.mxu0 %v51
    %236 = vmatprep.subr.mxu0 0.0
    %237 = vmatpush1.msra.mxu0 %v52
    %238 = vmatprep.subr.mxu0 0.0
    %239 = vmatpush1.msra.mxu0 %v53
    %240 = vmatprep.subr.mxu0 0.0
    %241 = vmatpush1.msra.mxu0 %v54
    %242 = vmatprep.subr.mxu0 0.0
    %243 = vmatpush1.msra.mxu0 %v55
    %244 = vmatprep.subr.mxu0 0.0
    %245 = vmatpush1.msra.mxu0 %v56
    %246 = vmatprep.subr.mxu0 0.0
    %247 = vmatpush1.msra.mxu0 %v57
    %248 = vmatprep.subr.mxu0 0.0
    %249 = vmatpush1.msra.mxu0 %v58
    %250 = vmatprep.subr.mxu0 0.0
    %251 = vmatpush1.msra.mxu0 %v59
    %252 = vmatprep.subr.mxu0 0.0
    %253 = vmatpush1.msra.mxu0 %v60
    %254 = vmatprep.subr.mxu0 0.0
    %255 = vmatpush1.msra.mxu0 %v61
    %256 = vmatprep.subr.mxu0 0.0
    %257 = vmatpush1.msra.mxu0 %v62
    %258 = vmatprep.subr.mxu0 0.0
    %259 = vmatpush1.msra.mxu0 %v63
    %260 = vmatprep.subr.mxu0 0.0
    %261 = vmatpush1.msra.mxu0 0.0
    %262 = vmatprep.subr.mxu0 0.0
    %263 = vmatpush1.msra.mxu0 0.0
    %264 = vmatprep.subr.mxu0 0.0
    %265 = vmatpush1.msra.mxu0 0.0
    %266 = vmatprep.subr.mxu0 0.0
    %267 = vmatpush1.msra.mxu0 0.0
    %268 = vmatprep.subr.mxu0 0.0
    %269 = vmatpush1.msra.mxu0 0.0
    %270 = vmatprep.subr.mxu0 0.0
    %271 = vmatpush1.msra.mxu0 0.0
    %272 = vmatprep.subr.mxu0 0.0
    %273 = vmatpush1.msra.mxu0 0.0
    %274 = vmatprep.subr.mxu0 0.0
    %275 = vmatpush1.msra.mxu0 0.0
    %276 = vmatprep.subr.mxu0 0.0
    %277 = vmatpush1.msra.mxu0 0.0
    %278 = vmatprep.subr.mxu0 0.0
    %279 = vmatpush1.msra.mxu0 0.0
    %280 = vmatprep.subr.mxu0 0.0
    %281 = vmatpush1.msra.mxu0 0.0
    %282 = vmatprep.subr.mxu0 0.0
    %283 = vmatpush1.msra.mxu0 0.0
    %284 = vmatprep.subr.mxu0 0.0
    %285 = vmatpush1.msra.mxu0 0.0
    %286 = vmatprep.subr.mxu0 0.0
    %287 = vmatpush1.msra.mxu0 0.0
    %288 = vmatprep.subr.mxu0 0.0
    %289 = vmatpush1.msra.mxu0 0.0
    %290 = vmatprep.subr.mxu0 0.0
    %291 = vmatpush1.msra.mxu0 0.0
    %292 = vmatprep.mubr.f32.mxu0 0.0
    %293 = vmatmul.mubr.f32.gmra.mrb[0].mxu0 %v223
    %v294 = vpop.f32.mrb[0].mxu0
    %v295 = vadd.f32 %v227, %v294
    %v296 = vpop.f32.mrb[0].mxu0
    %297 = vdwg.mxu0
    %v298 = vtanh.pop %v295
    %300 = vrot.lane.b32.xlu0 %v298, 32
    %v301 = vpop.permute.xlu0 %300
    %v303 = vsub.f32 %v69, %v301
    %v304 = vmul.f32 %v303, %v303
    %v305 = vlaneseq
    %v306 = vshrl.u32 %v305, 7
    %v307 = vsub.s32 0, %v306
    %v308 = vrot.slane %v67, %v307
    %310 = vrot.lane.b32.xlu0 %v308, 32
    %v311 = vpop.permute.xlu0 %310
    %v313 = vmul.f32 %v304, %v311
    %315 = vrot.lane.b32.xlu0 %v313, 96
    %v316 = vpop.permute.xlu0 %315
    %vm318 = vcmask 31744
    %v319 = vsel %vm318, %v316, 0.0
    %320 = vadd.xlane.f32.xlu0 %v319
    %v321 = vpop.xlane.xlu0 %320
    %v322 = vmul.f32 %v321, 0.5
    %v323 = vlaneseq
    %v324 = vshrl.u32 %v323, 7
    %v325 = vsub.s32 0, %v324
    %v326 = vrot.slane %v68, %v325
    %v327 = vsub.f32 %v326, %v322
    %v328 = vlaneseq
    %v329 = vand.u32 %v328, 127
    %vm330 = vcmp.eq.s32.totalorder %v329, 0
    %vm331 = vcmp.eq.s32.totalorder %v329, 1
    %333 = vset.pattern.permute.xlu0 4
    %334 = vperm.xlu0 %333, %v295
    %v335 = vpop.permute.xlu0 %334
    %v337 = vsel %vm331, %v335, 0.0
    %339 = vset.pattern.permute.xlu0 0
    %340 = vperm.xlu0 %339, %v327
    %v341 = vpop.permute.xlu0 %340
    %v343 = vsel %vm330, %v341, %v337
    %vm344 = vcmask 64512
    %345 = vst.msk [vmem:[%s3] sm:$0xff] %vm344, %v343
    // Predicated region
    $region18: #{evaluate.1} parent=1 // pred_check
      _
    $region19: #{evaluate.1} parent=1 // pred_check_branch
      %347 = sbr.rel (0) target = $region21
    $region20: #{evaluate.1} parent=1 // pred_region
      _
    $region21: #{evaluate.1} parent=1 // pred_fallthru
      _
    // Predicated region
    $region22: #{evaluate.1} parent=1 // pred_check
      _
    $region23: #{evaluate.1} parent=1 // pred_check_branch
      %349 = sbr.rel (0) target = $region25
    $region24: #{evaluate.1} parent=1 // pred_region
      _
    $region25: #{evaluate.1} parent=1 // pred_fallthru
      _
    %350 = vsyncpa [#allocation3], 1

</llo_original>
